<compile_context>
chip_gen: v6e
topology: v6e:2x2x1
jax: 0.10.0
libtpu: 0.0.40
codegen_flags: <defaults>
</compile_context>

<pallas_src>
import jax
import jax.numpy as jnp
from jax.experimental import pallas as pl
from jax.experimental.pallas import tpu as pltpu


def _compress_kernel(x_ref, mask_ref, nnz_ref):
    """One row-tile: int8 nonzero mask + exact int32 nonzero count."""
    x = x_ref[...]
    nz = x != 0
    mask_ref[...] = nz.astype(jnp.int8)
    # Exact integer count of nonzeros in this tile (an f32 sum loses exactness
    # above 2^24); per-tile partials are reduced in plain JAX outside.
    nnz_ref[...] = jnp.sum(nz.astype(jnp.int32), keepdims=True)


# Row-tile step: int8 mask packs 32 rows per sublane group; 32 is also a
# multiple of the 8 (f32) / 16 (bf16, fp16) sublane-packing steps of the input.
_ROW_STEP = 32


def _plan_tiling(n_elems: int, in_itemsize: int, max_tile_bytes: int):
    """Pick a lane-dense 2-D view (rows, lanes) and a row-tile size.

    Returns (lanes, rows, tile_rows, padded_rows).  lanes is a multiple of
    128; tile_rows either divides padded_rows exactly or spans it entirely.
    Any shortfall is handled by zero-padding the flat view in the wrapper.
    """
    lanes = None
    for cand in (1024, 768, 512, 384, 256, 128):
        if n_elems % cand == 0:
            lanes = cand
            break
    if lanes is None:
        lanes = 512  # wrapper zero-pads the flat length up to a lanes multiple

    rows = -(-n_elems // lanes)  # ceil
    # Per-row bytes for one x row plus one int8 mask row (what actually lives
    # in VMEM per tile, double-buffered).
    bytes_per_row = lanes * (in_itemsize + 1)
    cap_rows = max(1, max_tile_bytes // bytes_per_row)

    if rows <= cap_rows:
        # Whole tensor in a single row-block (block == full dim: always legal).
        tile_rows = rows
    else:
        # Round the cap down to a _ROW_STEP multiple (but never below it).
        cap_rows = max(_ROW_STEP, (cap_rows // _ROW_STEP) * _ROW_STEP)
        # Prefer a step-multiple that divides rows exactly (no row padding).
        tile_rows = None
        r = _ROW_STEP
        while r <= cap_rows:
            if rows % r == 0:
                tile_rows = r
            r += _ROW_STEP
        if tile_rows is None:
            tile_rows = cap_rows  # rows get zero-padded up to a multiple

    padded_rows = -(-rows // tile_rows) * tile_rows
    return lanes, rows, tile_rows, padded_rows


def compressed_activation_forward(x, training=True, *,
                                  max_tile_bytes=8 * 1024 * 1024):
    """JAX/Pallas equivalent of CompressedActivation.forward ('simple')."""
    if not training:
        # Eval path: the PyTorch module does no compressor work at all.
        return x, None

    orig_shape = x.shape
    n_elems = x.size
    lanes, rows, tile_rows, padded_rows = _plan_tiling(
        n_elems, x.dtype.itemsize, max_tile_bytes)
    padded_elems = padded_rows * lanes
    num_tiles = padded_rows // tile_rows

    x_flat = x.reshape(-1)
    if padded_elems != n_elems:
        # Zero padding is correctness-free: padded zeros contribute nothing to
        # nnz and the padded mask tail is sliced off below.
        x_flat = jnp.concatenate(
            [x_flat, jnp.zeros((padded_elems - n_elems,), dtype=x.dtype)])
    x2d = x_flat.reshape(padded_rows, lanes)

    # VMEM budget: 2 pipeline buffers x (x tile + int8 mask tile) + headroom,
    # capped at 48 MiB so it stays safe on v7x's 64 MiB physical VMEM.
    tile_bytes = tile_rows * lanes * (x.dtype.itemsize + 1)
    vmem_limit = int(min(48 * 1024 * 1024,
                         max(8 * 1024 * 1024, 2 * tile_bytes + 2 * 1024 * 1024)))

    # TODO(synk): for v7x with tiny tiles, pipeline_mode=pl.Buffered(3) on the
    # input BlockSpec would hide DMA fill latency; left at the default double
    # buffering to keep lowering conservative across JAX versions.
    mask2d, nnz_partials = pl.pallas_call(
        _compress_kernel,
        grid=(num_tiles,),
        in_specs=[pl.BlockSpec((tile_rows, lanes), lambda i: (i, 0))],
        out_specs=(
            pl.BlockSpec((tile_rows, lanes), lambda i: (i, 0)),  # int8 mask
            pl.BlockSpec((1, 1), lambda i: (i, 0)),              # per-tile nnz
        ),
        out_shape=(
            jax.ShapeDtypeStruct((padded_rows, lanes), jnp.int8),
            jax.ShapeDtypeStruct((num_tiles, 1), jnp.int32),
        ),
        compiler_params=pltpu.CompilerParams(
            dimension_semantics=("parallel",),
            vmem_limit_bytes=vmem_limit,
        ),
    )(x2d)

    # Exact nonzero count.  Accumulate in int64 when x64 is enabled; otherwise
    # int32 is exact up to 2^31-1 nonzeros (>2 G-element activations).
    acc_dtype = jnp.int64 if jax.config.jax_enable_x64 else jnp.int32
    nnz = jnp.sum(nnz_partials, dtype=acc_dtype)
    sparsity = 1.0 - nnz.astype(jnp.float32) / jnp.float32(n_elems)

    mask_flat = mask2d.reshape(-1)
    if padded_elems != n_elems:
        mask_flat = mask_flat[:n_elems]
    mask = mask_flat.reshape(orig_shape)

    # TODO(synk): torch's values = x[mask] / indices = nonzero(mask) have
    # data-dependent output shapes; the dense int8 mask + exact count (plus x
    # itself, returned unchanged) stand in for them.
    compressed = {
        "mask": mask,            # int8 0/1, == (x != 0) (torch mask is bool)
        "nnz": nnz,
        "sparsity": sparsity,
        "shape": orig_shape,
        "dtype": x.dtype,
        "method": "simple",
    }
    # Forward output is an exact identity: return the input itself instead of
    # copying it through the kernel.
    return x, compressed


if __name__ == "__main__":
    key = jax.random.PRNGKey(0)

    def make_sparse(k, shape, dtype=jnp.float32):
        k1, k2 = jax.random.split(k)
        x = jax.random.normal(k1, shape, dtype=dtype)
        keep = jax.random.uniform(k2, shape) > 0.6
        return jnp.where(keep, x, 0).astype(dtype)

    def check(x, **kw):
        out, compressed = compressed_activation_forward(x, training=True, **kw)
        jax.block_until_ready(compressed["mask"])
        # Forward is an exact identity.
        assert out.shape == x.shape and out.dtype == x.dtype
        assert bool(jnp.all(out == x))
        # Mask / count / sparsity match the dense reference.
        ref_mask = (x != 0).astype(jnp.int8)
        assert compressed["mask"].dtype == jnp.int8
        assert compressed["mask"].shape == x.shape
        assert bool(jnp.all(compressed["mask"] == ref_mask))
        ref_nnz = int(jnp.sum((x != 0).astype(jnp.int32)))
        assert int(compressed["nnz"]) == ref_nnz
        ref_sparsity = float(jnp.mean((x == 0).astype(jnp.float32)))
        assert abs(float(compressed["sparsity"]) - ref_sparsity) < 1e-6

    k1, k2, k3, k4 = jax.random.split(key, 4)

    # Small NCHW activation, ~60% sparse (single-tile path).
    check(make_sparse(k1, (2, 4, 16, 16)))

    # Larger activation with a tiny tile budget to exercise the multi-tile
    # "parallel" grid (2 row-tiles of 32 rows) and the per-tile int32 partials.
    check(make_sparse(k2, (8, 8, 32, 32)), max_tile_bytes=64 * 1024)

    # Non-128-divisible element count exercises the zero-padding path.
    check(make_sparse(k3, (3, 5, 7, 11)))

    # bf16 input: int8 mask + dtype-aware tiling.
    check(make_sparse(k4, (2, 4, 16, 16), dtype=jnp.bfloat16))

    # Eval path: no kernel launch, returns (x, None).
    x_eval = make_sparse(jax.random.PRNGKey(1), (2, 4, 16, 16))
    out, compressed = compressed_activation_forward(x_eval, training=False)
    assert compressed is None and bool(jnp.all(out == x_eval))

    print("KERNEL_OK")
</pallas_src>

<mosaic_0001>
module attributes {stable_mosaic.version = 11 : i64} {
  func.func @_compress_kernel(%arg0: i32, %arg1: memref<2x1024xf32, #tpu.memory_space<vmem>>, %arg2: memref<2x1024xi8, #tpu.memory_space<vmem>>, %arg3: memref<1x1xi32, #tpu.memory_space<vmem>>) attributes {dimension_semantics = [#tpu.dimension_semantics<parallel>], iteration_bounds = array<i64: 1>, scalar_prefetch = 0 : i64, scratch_operands = 0 : i64, tpu.core_type = #tpu.core_type<tc>, window_params = [{transform_indices = @transform_0, window_bounds = array<i64: 2, 1024>}, {transform_indices = @transform_1, window_bounds = array<i64: 2, 1024>}, {transform_indices = @transform_2, window_bounds = array<i64: 1, 1>}]} {
    %c0 = arith.constant 0 : index
    %c0_0 = arith.constant 0 : index
    %0 = vector.load %arg1[%c0, %c0_0] : memref<2x1024xf32, #tpu.memory_space<vmem>>, vector<2x1024xf32>
    %cst = arith.constant 0.000000e+00 : f32
    %1 = vector.broadcast %cst : f32 to vector<2x1024xf32>
    %2 = arith.cmpf one, %0, %1 : vector<2x1024xf32>
    %3 = arith.extui %2 : vector<2x1024xi1> to vector<2x1024xi8>
    %c0_1 = arith.constant 0 : index
    %c0_2 = arith.constant 0 : index
    %4 = vector.load %arg2[%c0_1, %c0_2] : memref<2x1024xi8, #tpu.memory_space<vmem>>, vector<2x1024xi8>
    tpu.vector_store %arg2[%c0_1, %c0_2], %3 {strides = array<i32>} : memref<2x1024xi8, #tpu.memory_space<vmem>>, vector<2x1024xi8>,
    %5 = arith.extui %2 : vector<2x1024xi1> to vector<2x1024xi32>
    %6 = vector.shape_cast %5 : vector<2x1024xi32> to vector<1x2x1024xi32>
    %cst_3 = arith.constant dense<0> : vector<1xi32>
    %7 = vector.multi_reduction <add>, %6, %cst_3 [1, 2] : vector<1x2x1024xi32> to vector<1xi32>
    %8 = vector.shape_cast %7 : vector<1xi32> to vector<1x1x1xi32>
    %9 = vector.extract %8[0, 0, 0] : i32 from vector<1x1x1xi32>
    %10 = vector.broadcast %9 : i32 to vector<1x1xi32>
    %c0_4 = arith.constant 0 : index
    %c0_5 = arith.constant 0 : index
    %11 = vector.load %arg3[%c0_4, %c0_5] : memref<1x1xi32, #tpu.memory_space<vmem>>, vector<1x1xi32>
    tpu.vector_store %arg3[%c0_4, %c0_5], %10 {strides = array<i32>} : memref<1x1xi32, #tpu.memory_space<vmem>>, vector<1x1xi32>,
    return
  }
  func.func @transform_0(%arg0: i32) -> (i32, i32) {
    %c0_i32 = arith.constant 0 : i32
    %c0_i32_0 = arith.constant 0 : i32
    return %arg0, %c0_i32 : i32, i32
  }
  func.func @transform_1(%arg0: i32) -> (i32, i32) {
    %c0_i32 = arith.constant 0 : i32
    %c0_i32_0 = arith.constant 0 : i32
    return %arg0, %c0_i32 : i32, i32
  }
  func.func @transform_2(%arg0: i32) -> (i32, i32) {
    %c0_i32 = arith.constant 0 : i32
    %c0_i32_0 = arith.constant 0 : i32
    return %arg0, %c0_i32 : i32, i32
  }
}

</mosaic_0001>

<llo_original>
// kernel: tpu_custom_call.1
$region0: #{tpu_custom_call.1}
  #allocation0 [shape = 'u32[]', space=smem, size = 0x4, offset = 0x4, fixed_abs, tag = 'smem constant byte address 0x4 - core index']
  #allocation1 [shape = 'u32[144,128]{1,0:T(1,128)}', space=vmem, size = 0x12000, scoped, tag = 'internal scratch']
  %s0 = inlined_call_operand.hbm [shape: f32[2,1024], index: 0, kind: input, shape index: {}]
  %s1 = inlined_call_operand.hbm [shape: s8[2,1024], index: 1, kind: output, shape index: {0}]
  %s2 = inlined_call_operand.hbm [shape: s32[1,1], index: 2, kind: output, shape index: {1}]
  %3 = xla_tuple %s1, %s2
  %s4 = sld [smem:[#allocation0]]
  $region26: #{tpu_custom_call.1} parent=0
    _
  %s6 = ssub.s32 1, %s4
  %s7 = scalar_select 0, %s6, %s4
  $region1: #{tpu_custom_call.1} parent=0
    #allocation2 [shape = 'u8[8192]{0}', space=vmem, size = 0x2000, scoped, tag = 'input window, operand 0, single buffered']
    #allocation3 [shape = 's32[1]{0}', space=sflag, size = 0x4, scoped, tag = 'scoped memory for tpu_custom_call.1']
    #allocation4 [shape = 's32[1]{0}', space=sflag, size = 0x4, scoped, tag = 'scoped memory for tpu_custom_call.1']
    #allocation5 [shape = 'u8[4096]{0}', space=vmem, size = 0x1000, scoped, tag = 'output window, operand 0, single buffered']
    #allocation6 [shape = 'u8[512]{0}', space=vmem, size = 0x400, scoped, tag = 'output window, operand 1, single buffered']
    #allocation7 [shape = 's32[1]{0}', space=sflag, size = 0x4, scoped, tag = 'scoped memory for tpu_custom_call.1']
    %8 = vsyncpa [#allocation3], 0
    %9 = vsyncpa [#allocation4], 0
    %10 = vsyncpa [#allocation7], 0
    // Predicated region
    $region2: #{tpu_custom_call.1} parent=1 // pred_check
      _
    $region3: #{tpu_custom_call.1} parent=1 // pred_check_branch
      %12 = sbr.rel (0) target = $region5
    $region4: #{tpu_custom_call.1} parent=1 // pred_region
      %s14 = ssub.s32 256, 256
      %15 = vsyncadd [#allocation3], %s14
      %s17 = sshll.u32 [#allocation2], 4
      %s18 = int_to_ptr.vmem [resolvable:$true] %s17
      %20 = dma.hbm_to_vmem [thread:$0]  %s0, 256, %s18, [#allocation3]
    $region5: #{tpu_custom_call.1} parent=1 // pred_fallthru
      _
    // Predicated region
    $region6: #{tpu_custom_call.1} parent=1 // pred_check
      _
    $region7: #{tpu_custom_call.1} parent=1 // pred_check_branch
      %22 = sbr.rel (0) target = $region9
    $region8: #{tpu_custom_call.1} parent=1 // pred_region
      %23 = dma.done [#allocation3], 256
    $region9: #{tpu_custom_call.1} parent=1 // pred_fallthru
      _
    %v26 = vld [vmem:[#allocation2] sm:$0xff]
    %v27 = vld [vmem:[#allocation2 + $0x8] sm:$0xff]
    %vm28 = vcmp.ne.f32.partialorder %v26, 0.0
    %vm29 = vcmp.ne.f32.partialorder %v27, 0.0
    %v30 = vsel %vm28, 1, 0
    %v31 = vsel %vm29, 1, 0
    %v32 = vcombine.high %v30, %v30
    %v34 = vunpack.c.l.s4 1983009808
    %v35 = vunpack.c.0.s8 %v34
    %v36 = vlaneseq
    %v37 = vshrl.u32 %v36, 7
    %v38 = vsub.s32 %v35, %v37
    %v39 = vrot.slane %v30, %v38
    %v41 = vunpack.c.l.s4 1983009808
    %v42 = vunpack.c.0.s8 %v41
    %v43 = vlaneseq
    %v44 = vshrl.u32 %v43, 7
    %v45 = vsub.s32 %v42, %v44
    %v46 = vrot.slane %v32, %v45
    %v47 = vcombine.high %v31, %v31
    %v49 = vunpack.c.l.s4 1983009808
    %v50 = vunpack.c.0.s8 %v49
    %v51 = vlaneseq
    %v52 = vshrl.u32 %v51, 7
    %v53 = vsub.s32 %v50, %v52
    %v54 = vrot.slane %v31, %v53
    %v56 = vunpack.c.l.s4 1983009808
    %v57 = vunpack.c.0.s8 %v56
    %v58 = vlaneseq
    %v59 = vshrl.u32 %v58, 7
    %v60 = vsub.s32 %v57, %v59
    %v61 = vrot.slane %v47, %v60
    %vm62 = vcmp.ne.s32.totalorder %v39, 0
    %vm63 = vcmp.ne.s32.totalorder %v46, 0
    %vm64 = vcmp.ne.s32.totalorder %v54, 0
    %vm65 = vcmp.ne.s32.totalorder %v61, 0
    %v66 = vsel %vm62, 1, 0
    %v67 = vsel %vm63, 1, 0
    %v68 = vsel %vm64, 1, 0
    %v69 = vsel %vm65, 1, 0
    %v70 = vpack.c.b16 %v67, %v66
    %v71 = vpack.c.b16 %v69, %v68
    %v72 = vpack.c.b8 %v71, %v70
    %vm73 = vnez %v72
    %v74 = vsel %vm73, 16843009, 0
    %v75 = vcombine.high %v74, %v74
    %v77 = vunpack.c.l.s4 1966171168
    %v78 = vunpack.c.0.s8 %v77
    %v79 = vlaneseq
    %v80 = vshrl.u32 %v79, 7
    %v81 = vsub.s32 %v78, %v80
    %v82 = vrot.slane %v74, %v81
    %v84 = vunpack.c.l.s4 1966171168
    %v85 = vunpack.c.0.s8 %v84
    %v86 = vlaneseq
    %v87 = vshrl.u32 %v86, 7
    %v88 = vsub.s32 %v85, %v87
    %v89 = vrot.slane %v75, %v88
    %v90 = vcombine.high %v82, %v82
    %v91 = vcombine.high %v89, %v89
    %v93 = vunpack.c.l.s4 1966171168
    %v94 = vunpack.c.0.s8 %v93
    %v95 = vlaneseq
    %v96 = vshrl.u32 %v95, 7
    %v97 = vsub.s32 %v94, %v96
    %v98 = vrot.slane %v82, %v97
    %v100 = vunpack.c.l.s4 1966171168
    %v101 = vunpack.c.0.s8 %v100
    %v102 = vlaneseq
    %v103 = vshrl.u32 %v102, 7
    %v104 = vsub.s32 %v101, %v103
    %v105 = vrot.slane %v89, %v104
    %v107 = vunpack.c.l.s4 1966171168
    %v108 = vunpack.c.0.s8 %v107
    %v109 = vlaneseq
    %v110 = vshrl.u32 %v109, 7
    %v111 = vsub.s32 %v108, %v110
    %v112 = vrot.slane %v90, %v111
    %v114 = vunpack.c.l.s4 1966171168
    %v115 = vunpack.c.0.s8 %v114
    %v116 = vlaneseq
    %v117 = vshrl.u32 %v116, 7
    %v118 = vsub.s32 %v115, %v117
    %v119 = vrot.slane %v91, %v118
    %v120 = vcombine.high %v98, %v98
    %v121 = vcombine.high %v105, %v105
    %v122 = vcombine.high %v112, %v112
    %v123 = vcombine.high %v119, %v119
    %vm124 = vnez %v98
    %vm125 = vnez %v112
    %vm126 = vnez %v120
    %vm127 = vnez %v122
    %vm128 = vnez %v105
    %vm129 = vnez %v119
    %vm130 = vnez %v121
    %vm131 = vnez %v123
    %v132 = vsel %vm124, 16843009, 0
    %v133 = vsel %vm125, 16843009, 0
    %v134 = vsel %vm126, 16843009, 0
    %v135 = vsel %vm127, 16843009, 0
    %v136 = vsel %vm128, 16843009, 0
    %v137 = vsel %vm129, 16843009, 0
    %v138 = vsel %vm130, 16843009, 0
    %v139 = vsel %vm131, 16843009, 0
    %v140 = vcombine.low %v132, %v133
    %v141 = vcombine.low %v134, %v135
    %v142 = vcombine.low %v136, %v137
    %v143 = vcombine.low %v138, %v139
    %v145 = vunpack.c.l.s4 1966171168
    %v146 = vunpack.c.0.s8 %v145
    %v147 = vlaneseq
    %v148 = vshrl.u32 %v147, 7
    %v149 = vsub.s32 %v146, %v148
    %v150 = vrot.slane %v140, %v149
    %v152 = vunpack.c.l.s4 1966171168
    %v153 = vunpack.c.0.s8 %v152
    %v154 = vlaneseq
    %v155 = vshrl.u32 %v154, 7
    %v156 = vsub.s32 %v153, %v155
    %v157 = vrot.slane %v141, %v156
    %v159 = vunpack.c.l.s4 1966171168
    %v160 = vunpack.c.0.s8 %v159
    %v161 = vlaneseq
    %v162 = vshrl.u32 %v161, 7
    %v163 = vsub.s32 %v160, %v162
    %v164 = vrot.slane %v142, %v163
    %v166 = vunpack.c.l.s4 1966171168
    %v167 = vunpack.c.0.s8 %v166
    %v168 = vlaneseq
    %v169 = vshrl.u32 %v168, 7
    %v170 = vsub.s32 %v167, %v169
    %v171 = vrot.slane %v143, %v170
    %v172 = vcombine.low %v150, %v157
    %v173 = vcombine.low %v164, %v171
    %v175 = vunpack.c.l.s4 1966171168
    %v176 = vunpack.c.0.s8 %v175
    %v177 = vlaneseq
    %v178 = vshrl.u32 %v177, 7
    %v179 = vsub.s32 %v176, %v178
    %v180 = vrot.slane %v172, %v179
    %v182 = vunpack.c.l.s4 1966171168
    %v183 = vunpack.c.0.s8 %v182
    %v184 = vlaneseq
    %v185 = vshrl.u32 %v184, 7
    %v186 = vsub.s32 %v183, %v185
    %v187 = vrot.slane %v173, %v186
    %v188 = vcombine.low %v180, %v187
    %vm189 = vcmask 1040384
    %vm190 = vsmask.f32 256
    %vm191 = vmand %vm189, %vm190
    %vm192 = vcmask 1041409
    %vm193 = vsmask.f32 1280
    %vm194 = vmand %vm192, %vm193
    %vm195 = vmor %vm194, %vm191
    %vm196 = vcmask 1042434
    %vm197 = vsmask.f32 2304
    %vm198 = vmand %vm196, %vm197
    %vm199 = vmor %vm198, %vm195
    %vm200 = vcmask 1043459
    %vm201 = vsmask.f32 3328
    %vm202 = vmand %vm200, %vm201
    %vm203 = vmor %vm202, %vm199
    %vm204 = vcmask 1044484
    %vm205 = vsmask.f32 4352
    %vm206 = vmand %vm204, %vm205
    %vm207 = vmor %vm206, %vm203
    %vm208 = vcmask 1045509
    %vm209 = vsmask.f32 5376
    %vm210 = vmand %vm208, %vm209
    %vm211 = vmor %vm210, %vm207
    %vm212 = vcmask 1046534
    %vm213 = vsmask.f32 6400
    %vm214 = vmand %vm212, %vm213
    %vm215 = vmor %vm214, %vm211
    %vm216 = vcmask 1047559
    %vm217 = vsmask.f32 7424
    %vm218 = vmand %vm216, %vm217
    %vm219 = vmor %vm218, %vm215
    %v220 = vld [vmem:[#allocation5] sm:$0xff]
    %v221 = vsel %vm219, %v188, %v220
    %222 = vst [vmem:[#allocation5] sm:$0xff] %v221
    %v223 = vcombine.high %v39, %v39
    %v224 = vcombine.high %v46, %v46
    %v225 = vcombine.high %v54, %v54
    %v226 = vcombine.high %v61, %v61
    %vm227 = vcmask 1041408
    %v228 = vsel %vm227, %v39, 0
    %v229 = vsel %vm227, %v223, 0
    %v230 = vsel %vm227, %v46, 0
    %v231 = vsel %vm227, %v224, 0
    %v232 = vsel %vm227, %v54, 0
    %v233 = vadd.s32 %v228, %v232
    %v234 = vsel %vm227, %v225, 0
    %v235 = vadd.s32 %v229, %v234
    %v236 = vsel %vm227, %v61, 0
    %v237 = vadd.s32 %v230, %v236
    %v238 = vsel %vm227, %v226, 0
    %v239 = vadd.s32 %v231, %v238
    %v240 = vadd.s32 %v233, %v235
    %v241 = vadd.s32 %v237, %v239
    %v242 = vadd.s32 %v240, %v241
    %v243 = vand.u32 %v242, 65535
    %v244 = vshrl.u32 %v242, 16
    %v245 = vcvt.s32.f32 %v243
    %v246 = vcvt.s32.f32 %v244
    %247 = vadd.xlane.f32.xlu0 %v245
    %v248 = vpop.xlane.xlu0 %247
    %249 = vadd.xlane.f32.xlu0 %v246
    %v250 = vpop.xlane.xlu0 %249
    %v251 = vcvt.f32.s32 %v248
    %v252 = vcvt.f32.s32 %v250
    %v253 = vshll.u32 %v252, 16
    %v254 = vadd.s32 %v253, %v251
    %v255 = vrot.slane %v254, 4
    %v256 = vadd.s32 %v254, %v255
    %v257 = vrot.slane %v256, 2
    %v258 = vadd.s32 %v256, %v257
    %v259 = vrot.slane %v258, 1
    %v260 = vadd.s32 %v258, %v259
    %s261 = vtos %v260
    %v262 = vstv %s261
    %vm263 = vcmask 0
    %264 = vst.msk [vmem:[#allocation6] sm:$0x1] %vm263, %v262
    // Predicated region
    $region10: #{tpu_custom_call.1} parent=1 // pred_check
      _
    $region11: #{tpu_custom_call.1} parent=1 // pred_check_branch
      %266 = sbr.rel (0) target = $region13
    $region12: #{tpu_custom_call.1} parent=1 // pred_region
      %s268 = ssub.s32 128, 128
      %269 = vsyncadd [#allocation4], %s268
      %s271 = sshll.u32 [#allocation5], 4
      %s272 = int_to_ptr.vmem [resolvable:$true] %s271
      %274 = dma.vmem_to_hbm [thread:$0]  %s272, 128, %s1, [#allocation4]
    $region13: #{tpu_custom_call.1} parent=1 // pred_fallthru
      _
    // Predicated region
    $region14: #{tpu_custom_call.1} parent=1 // pred_check
      _
    $region15: #{tpu_custom_call.1} parent=1 // pred_check_branch
      %276 = sbr.rel (0) target = $region17
    $region16: #{tpu_custom_call.1} parent=1 // pred_region
      %s278 = ssub.s32 16, 16
      %279 = vsyncadd [#allocation7], %s278
      %s281 = sshll.u32 [#allocation6], 4
      %s282 = int_to_ptr.vmem [resolvable:$true] %s281
      %284 = dma.vmem_to_hbm [thread:$0]  %s282, 16, %s2, [#allocation7]
    $region17: #{tpu_custom_call.1} parent=1 // pred_fallthru
      _
    // Predicated region
    $region18: #{tpu_custom_call.1} parent=1 // pred_check
      _
    $region19: #{tpu_custom_call.1} parent=1 // pred_check_branch
      %286 = sbr.rel (0) target = $region21
    $region20: #{tpu_custom_call.1} parent=1 // pred_region
      %287 = dma.done [#allocation4], 128
    $region21: #{tpu_custom_call.1} parent=1 // pred_fallthru
      _
    // Predicated region
    $region22: #{tpu_custom_call.1} parent=1 // pred_check
      _
    $region23: #{tpu_custom_call.1} parent=1 // pred_check_branch
      %289 = sbr.rel (0) target = $region25
    $region24: #{tpu_custom_call.1} parent=1 // pred_region
      %290 = dma.done [#allocation7], 16
    $region25: #{tpu_custom_call.1} parent=1 // pred_fallthru
      _
    %291 = vsyncpa [#allocation3], 1
    %292 = vsyncpa [#allocation4], 1
    %293 = vsyncpa [#allocation7], 1

</llo_original>
